<compile_context>
chip_gen: v7x
topology: tpu7x:2x2x1
jax: 0.10.0
libtpu: 0.0.40
codegen_flags: <defaults>
</compile_context>

<pallas_src>
import numpy as np
import jax
import jax.numpy as jnp
from jax.experimental import pallas as pl
from jax.experimental.pallas import tpu as pltpu

LANE = 128     # lanes per folded row (fast axis of the match fold)
SUB = 8        # sublane granularity (block rows must be a multiple of 8)
TS_MAX = 1024  # max sublane rows per grid step (= 131072 matches / step)


def _pnp_loss_kernel(params_ref,   # SMEM (32,) f32: Tcw(12), K(9), H, W, alpha_thres, inlier_thres
                     meta_ref,     # SMEM (1,)  i32: M (number of real matches)
                     in_ref,       # VMEM (6, TS, 128): x,y,z, qu,qv, alpha
                     out_ref,      # VMEM (2, TS, 128): row0 rl2q_2d_err, row1 outlier_loss
                     part_ref):    # VMEM (1, 8, 128): per-tile partials (row0 inliers, row1 selected)
    p = params_ref
    ts = in_ref.shape[1]

    X = in_ref[0, :, :]
    Y = in_ref[1, :, :]
    Z = in_ref[2, :, :]
    qu = in_ref[3, :, :]
    qv = in_ref[4, :, :]
    alpha = in_ref[5, :, :]

    # Padding mask computed in-kernel: global match index < M.
    row = jax.lax.broadcasted_iota(jnp.int32, (ts, LANE), 0)
    lane = jax.lax.broadcasted_iota(jnp.int32, (ts, LANE), 1)
    gidx = (pl.program_id(0) * ts + row) * LANE + lane
    in_bounds = gidx < meta_ref[0]

    # camera-frame coordinates:  Xc = R @ X + t   (Tcw row-major in p[0:12])
    Xc = p[0] * X + p[1] * Y + p[2] * Z + p[3]
    Yc = p[4] * X + p[5] * Y + p[6] * Z + p[7]
    Zc = p[8] * X + p[9] * Y + p[10] * Z + p[11]

    # pinhole projection (K row-major in p[12:21]); canonical K[2,:]=[0,0,1]
    # is assumed, so the homogeneous w equals the camera depth Zc.
    uh = p[12] * Xc + p[13] * Yc + p[14] * Zc
    vh = p[15] * Xc + p[16] * Yc + p[17] * Zc
    wh = Zc

    H_img = p[21]
    W_img = p[22]
    alpha_thres = p[23]
    inlier_thres = p[24]

    # cam_opt_gpu.is_in_t in homogeneous coordinates: in front of the camera
    # and inside the image -- no division feeds the mask path.
    in_img = ((wh > 0.0) & (uh >= 0.0) & (uh < W_img * wh) &
              (vh >= 0.0) & (vh < H_img * wh))
    valid = in_img & in_bounds

    # Exact reciprocal (EUP + refinement); u/v only feed the error term.
    inv_w = pl.reciprocal(wh)
    u = uh * inv_w
    v = vh * inv_w
    du = u - qu
    dv = v - qv
    err_raw = jnp.sqrt(du * du + dv * dv)
    err = jnp.where(valid, err_raw, 0.0)      # select, not multiply: no Inf*0 NaN
    loss = err * alpha                        # outlier_loss

    out_ref[0, :, :] = err                    # rl2q_2d_err (zero for invalid / padding)
    out_ref[1, :, :] = loss

    # compute_selected_inliers: counts over matches with alpha > alpha_thres.
    # Emit per-tile / per-lane partial counts so the grid axis stays parallel.
    sel = valid & (alpha > alpha_thres)
    inl = sel & (err < inlier_thres)
    inl_lane = jnp.sum(inl.astype(jnp.float32), axis=0, keepdims=True)   # (1, 128)
    sel_lane = jnp.sum(sel.astype(jnp.float32), axis=0, keepdims=True)   # (1, 128)
    part_ref[0, :, :] = jnp.concatenate(
        [inl_lane, sel_lane, jnp.zeros((SUB - 2, LANE), jnp.float32)], axis=0)


def dlt_pnp_loss(r_xyz, r_alpha, q_pos_2d, q_K, q_gt_Tcw, q_dim_hw, r2q_matches,
                 dlt_inlier_proj_thres=14.0, alpha_thres=0.5):
    """Returns (outlier_loss[M], r2q_repj_err[1], rl2q_2d_err[M],
                sel_inlier_ratio (scalar), num_inliers (scalar))."""
    M = int(r2q_matches.shape[0])

    # corres_pos_from_pairs: gather the correspondences (stays in XLA), then
    # build the 6 coordinate planes column-wise -- no (Mpad,7) slab transpose.
    ridx = r2q_matches[:, 0]
    qidx = r2q_matches[:, 1]
    xyz = jnp.take(r_xyz, ridx, axis=0).astype(jnp.float32)       # (M, 3)
    q2d = jnp.take(q_pos_2d, qidx, axis=0).astype(jnp.float32)    # (M, 2)
    al = jnp.take(r_alpha, ridx, axis=0).astype(jnp.float32)      # (M,)

    m_rows = max(1, -(-M // LANE))            # sublane rows needed
    if m_rows <= SUB:
        ts = SUB                              # too small to split below one (8,128) block
    else:
        target = -(-m_rows // 4)              # aim for ~4 tiles: megacore + DMA overlap
        ts = min(TS_MAX, max(SUB, -(-target // SUB) * SUB))
    rows_pad = -(-m_rows // ts) * ts
    n_tiles = rows_pad // ts
    Mpad = rows_pad * LANE

    def plane(col):                           # (M,) -> (rows_pad, 128)
        return jnp.pad(col, (0, Mpad - M)).reshape(rows_pad, LANE)

    packed = jnp.stack([plane(xyz[:, 0]), plane(xyz[:, 1]), plane(xyz[:, 2]),
                        plane(q2d[:, 0]), plane(q2d[:, 1]), plane(al)],
                       axis=0)                # (6, rows_pad, 128)

    H, W = q_dim_hw
    params = jnp.concatenate([
        q_gt_Tcw.reshape(-1).astype(jnp.float32),                           # 12
        q_K.reshape(-1).astype(jnp.float32),                                # 9
        jnp.array([float(H), float(W), alpha_thres, dlt_inlier_proj_thres],
                  jnp.float32),                                             # 4
    ])
    params = jnp.pad(params, (0, 32 - params.shape[0]))
    meta = jnp.array([M], jnp.int32)

    out, partials = pl.pallas_call(
        _pnp_loss_kernel,
        out_shape=(jax.ShapeDtypeStruct((2, rows_pad, LANE), jnp.float32),
                   jax.ShapeDtypeStruct((n_tiles, SUB, LANE), jnp.float32)),
        grid_spec=pltpu.PrefetchScalarGridSpec(
            num_scalar_prefetch=0,
            grid=(n_tiles,),
            in_specs=[pl.BlockSpec(memory_space=pltpu.MemorySpace.SMEM),
                      pl.BlockSpec(memory_space=pltpu.MemorySpace.SMEM),
                      pl.BlockSpec((6, ts, LANE), lambda i: (0, i, 0))],
            out_specs=(pl.BlockSpec((2, ts, LANE), lambda i: (0, i, 0)),
                       pl.BlockSpec((1, SUB, LANE), lambda i: (i, 0, 0))),
        ),
        compiler_params=pltpu.CompilerParams(
            dimension_semantics=("parallel",)),   # no carried state -> shardable across TCs
    )(params, meta, packed)

    rl2q_2d_err = out[0].reshape(-1)[:M]
    outlier_loss = out[1].reshape(-1)[:M]
    num_inliers = jnp.sum(partials[:, 0, :])
    num_sel = jnp.sum(partials[:, 1, :])
    sel_inlier_ratio = num_inliers / jnp.maximum(num_sel, 1.0)

    # TODO(synk): DLT_P + reprojection branch (SVD) not expressible in Pallas;
    # return the module's zeros(1) fallback for r2q_repj_err.
    r2q_repj_err = jnp.zeros((1,), outlier_loss.dtype)
    # TODO(synk): the module's data-dependent `return (None, None, None, None)`
    # when num_inliers < 10 is left to the caller (check `num_inliers`).
    return outlier_loss, r2q_repj_err, rl2q_2d_err, sel_inlier_ratio, num_inliers


if __name__ == "__main__":
    key = jax.random.PRNGKey(0)
    k1, k2, k3, k4 = jax.random.split(key, 4)

    N = 256          # reference 3D points
    M = 200          # matches
    H_img, W_img = 120, 160

    # 3D points in front of the camera
    r_xyz = jnp.concatenate(
        [jax.random.uniform(k1, (N, 2), minval=-1.0, maxval=1.0),
         jax.random.uniform(k2, (N, 1), minval=2.0, maxval=6.0)], axis=1
    ).astype(jnp.float32)
    r_alpha = jax.random.uniform(k3, (N,), minval=0.0, maxval=1.0).astype(jnp.float32)

    q_K = jnp.array([[100.0, 0.0, 80.0],
                     [0.0, 100.0, 60.0],
                     [0.0, 0.0, 1.0]], jnp.float32)
    q_gt_Tcw = jnp.array([[1.0, 0.0, 0.0, 0.05],
                          [0.0, 1.0, 0.0, -0.02],
                          [0.0, 0.0, 1.0, 0.10]], jnp.float32)

    # ground-truth reprojections + noise as the "detected" query keypoints
    Xc = r_xyz @ q_gt_Tcw[:, :3].T + q_gt_Tcw[:, 3]
    uvw = Xc @ q_K.T
    gt2d = uvw[:, :2] / uvw[:, 2:3]
    q_pos_2d = (gt2d + 2.0 * jax.random.normal(k4, (N, 2))).astype(jnp.float32)

    r2q_matches = jnp.stack([jnp.arange(M, dtype=jnp.int32),
                             jnp.arange(M, dtype=jnp.int32)], axis=1)

    outs = dlt_pnp_loss(r_xyz, r_alpha, q_pos_2d, q_K, q_gt_Tcw,
                        (H_img, W_img), r2q_matches)
    outs = jax.block_until_ready(outs)
    outlier_loss, r2q_repj_err, rl2q_2d_err, inlier_ratio, num_inliers = outs

    # float64 numpy reference for the masked error / loss path
    m_r = np.asarray(r2q_matches[:, 0])
    m_q = np.asarray(r2q_matches[:, 1])
    xyz_r = np.asarray(r_xyz, np.float64)[m_r]
    q2d_r = np.asarray(q_pos_2d, np.float64)[m_q]
    al_r = np.asarray(r_alpha, np.float64)[m_r]
    T_r = np.asarray(q_gt_Tcw, np.float64)
    K_r = np.asarray(q_K, np.float64)
    Xc_r = xyz_r @ T_r[:, :3].T + T_r[:, 3]
    uvw_r = Xc_r @ K_r.T
    p2d = uvw_r[:, :2] / uvw_r[:, 2:3]
    valid = ((p2d[:, 0] >= 0) & (p2d[:, 0] < W_img) &
             (p2d[:, 1] >= 0) & (p2d[:, 1] < H_img) & (Xc_r[:, 2] > 0))
    ref_err = np.linalg.norm(p2d - q2d_r, axis=1) * valid
    ref_loss = ref_err * al_r
    assert np.allclose(np.asarray(rl2q_2d_err), ref_err, atol=2e-2, rtol=1e-3)
    assert np.allclose(np.asarray(outlier_loss), ref_loss, atol=2e-2, rtol=1e-3)

    # inlier-statistics reference (small slack for threshold-boundary rounding)
    sel_mask = valid & (al_r > 0.5)
    inl_mask = sel_mask & (ref_err < 14.0)
    ref_inl = float(np.sum(inl_mask))
    ref_sel = float(np.sum(sel_mask))
    ref_ratio = ref_inl / max(ref_sel, 1.0)
    assert abs(float(num_inliers) - ref_inl) <= 1.0
    assert abs(float(inlier_ratio) - ref_ratio) <= 0.02

    print("KERNEL_OK")
</pallas_src>

<mosaic_0001>
module attributes {stable_mosaic.version = 11 : i64} {
  func.func @_pnp_loss_kernel(%arg0: i32, %arg1: memref<32xf32, #tpu.memory_space<smem>>, %arg2: memref<1xi32, #tpu.memory_space<smem>>, %arg3: memref<6x8x128xf32, #tpu.memory_space<vmem>>, %arg4: memref<2x8x128xf32, #tpu.memory_space<vmem>>, %arg5: memref<1x8x128xf32, #tpu.memory_space<vmem>>) attributes {dimension_semantics = [#tpu.dimension_semantics<parallel>], iteration_bounds = array<i64: 1>, scalar_prefetch = 0 : i64, scratch_operands = 0 : i64, tpu.core_type = #tpu.core_type<tc>, window_params = [{transform_indices = @transform_0, window_bounds = array<i64: 32>}, {transform_indices = @transform_1, window_bounds = array<i64: 1>}, {transform_indices = @transform_2, window_bounds = array<i64: 6, 8, 128>}, {transform_indices = @transform_3, window_bounds = array<i64: 2, 8, 128>}, {transform_indices = @transform_4, window_bounds = array<i64: 1, 8, 128>}]} {
    %c0 = arith.constant 0 : index
    %c0_0 = arith.constant 0 : index
    %c0_1 = arith.constant 0 : index
    %0 = vector.load %arg3[%c0, %c0_0, %c0_1] : memref<6x8x128xf32, #tpu.memory_space<vmem>>, vector<1x8x128xf32>
    %1 = vector.shape_cast %0 : vector<1x8x128xf32> to vector<8x128xf32>
    %c1 = arith.constant 1 : index
    %c0_2 = arith.constant 0 : index
    %c0_3 = arith.constant 0 : index
    %2 = vector.load %arg3[%c1, %c0_2, %c0_3] : memref<6x8x128xf32, #tpu.memory_space<vmem>>, vector<1x8x128xf32>
    %3 = vector.shape_cast %2 : vector<1x8x128xf32> to vector<8x128xf32>
    %c2 = arith.constant 2 : index
    %c0_4 = arith.constant 0 : index
    %c0_5 = arith.constant 0 : index
    %4 = vector.load %arg3[%c2, %c0_4, %c0_5] : memref<6x8x128xf32, #tpu.memory_space<vmem>>, vector<1x8x128xf32>
    %5 = vector.shape_cast %4 : vector<1x8x128xf32> to vector<8x128xf32>
    %c3 = arith.constant 3 : index
    %c0_6 = arith.constant 0 : index
    %c0_7 = arith.constant 0 : index
    %6 = vector.load %arg3[%c3, %c0_6, %c0_7] : memref<6x8x128xf32, #tpu.memory_space<vmem>>, vector<1x8x128xf32>
    %7 = vector.shape_cast %6 : vector<1x8x128xf32> to vector<8x128xf32>
    %c4 = arith.constant 4 : index
    %c0_8 = arith.constant 0 : index
    %c0_9 = arith.constant 0 : index
    %8 = vector.load %arg3[%c4, %c0_8, %c0_9] : memref<6x8x128xf32, #tpu.memory_space<vmem>>, vector<1x8x128xf32>
    %9 = vector.shape_cast %8 : vector<1x8x128xf32> to vector<8x128xf32>
    %c5 = arith.constant 5 : index
    %c0_10 = arith.constant 0 : index
    %c0_11 = arith.constant 0 : index
    %10 = vector.load %arg3[%c5, %c0_10, %c0_11] : memref<6x8x128xf32, #tpu.memory_space<vmem>>, vector<1x8x128xf32>
    %11 = vector.shape_cast %10 : vector<1x8x128xf32> to vector<8x128xf32>
    %12 = tpu.iota {dimensions = array<i32: 0>} : vector<8x128xi32>
    %13 = tpu.iota {dimensions = array<i32: 1>} : vector<8x128xi32>
    %c8_i32 = arith.constant 8 : i32
    %14 = arith.muli %arg0, %c8_i32 : i32
    %15 = vector.broadcast %14 : i32 to vector<8x128xi32>
    %16 = arith.addi %15, %12 : vector<8x128xi32>
    %c128_i32 = arith.constant 128 : i32
    %17 = vector.broadcast %c128_i32 : i32 to vector<8x128xi32>
    %18 = arith.muli %16, %17 : vector<8x128xi32>
    %19 = arith.addi %18, %13 : vector<8x128xi32>
    %c0_12 = arith.constant 0 : index
    %20 = memref.load %arg2[%c0_12] : memref<1xi32, #tpu.memory_space<smem>>
    %21 = vector.broadcast %20 : i32 to vector<8x128xi32>
    %22 = arith.cmpi slt, %19, %21 : vector<8x128xi32>
    %c0_13 = arith.constant 0 : index
    %23 = memref.load %arg1[%c0_13] : memref<32xf32, #tpu.memory_space<smem>>
    %24 = vector.broadcast %23 : f32 to vector<8x128xf32>
    %25 = arith.mulf %24, %1 : vector<8x128xf32>
    %c1_14 = arith.constant 1 : index
    %26 = memref.load %arg1[%c1_14] : memref<32xf32, #tpu.memory_space<smem>>
    %27 = vector.broadcast %26 : f32 to vector<8x128xf32>
    %28 = arith.mulf %27, %3 : vector<8x128xf32>
    %29 = arith.addf %25, %28 : vector<8x128xf32>
    %c2_15 = arith.constant 2 : index
    %30 = memref.load %arg1[%c2_15] : memref<32xf32, #tpu.memory_space<smem>>
    %31 = vector.broadcast %30 : f32 to vector<8x128xf32>
    %32 = arith.mulf %31, %5 : vector<8x128xf32>
    %33 = arith.addf %29, %32 : vector<8x128xf32>
    %c3_16 = arith.constant 3 : index
    %34 = memref.load %arg1[%c3_16] : memref<32xf32, #tpu.memory_space<smem>>
    %35 = vector.broadcast %34 : f32 to vector<8x128xf32>
    %36 = arith.addf %33, %35 : vector<8x128xf32>
    %c4_17 = arith.constant 4 : index
    %37 = memref.load %arg1[%c4_17] : memref<32xf32, #tpu.memory_space<smem>>
    %38 = vector.broadcast %37 : f32 to vector<8x128xf32>
    %39 = arith.mulf %38, %1 : vector<8x128xf32>
    %c5_18 = arith.constant 5 : index
    %40 = memref.load %arg1[%c5_18] : memref<32xf32, #tpu.memory_space<smem>>
    %41 = vector.broadcast %40 : f32 to vector<8x128xf32>
    %42 = arith.mulf %41, %3 : vector<8x128xf32>
    %43 = arith.addf %39, %42 : vector<8x128xf32>
    %c6 = arith.constant 6 : index
    %44 = memref.load %arg1[%c6] : memref<32xf32, #tpu.memory_space<smem>>
    %45 = vector.broadcast %44 : f32 to vector<8x128xf32>
    %46 = arith.mulf %45, %5 : vector<8x128xf32>
    %47 = arith.addf %43, %46 : vector<8x128xf32>
    %c7 = arith.constant 7 : index
    %48 = memref.load %arg1[%c7] : memref<32xf32, #tpu.memory_space<smem>>
    %49 = vector.broadcast %48 : f32 to vector<8x128xf32>
    %50 = arith.addf %47, %49 : vector<8x128xf32>
    %c8 = arith.constant 8 : index
    %51 = memref.load %arg1[%c8] : memref<32xf32, #tpu.memory_space<smem>>
    %52 = vector.broadcast %51 : f32 to vector<8x128xf32>
    %53 = arith.mulf %52, %1 : vector<8x128xf32>
    %c9 = arith.constant 9 : index
    %54 = memref.load %arg1[%c9] : memref<32xf32, #tpu.memory_space<smem>>
    %55 = vector.broadcast %54 : f32 to vector<8x128xf32>
    %56 = arith.mulf %55, %3 : vector<8x128xf32>
    %57 = arith.addf %53, %56 : vector<8x128xf32>
    %c10 = arith.constant 10 : index
    %58 = memref.load %arg1[%c10] : memref<32xf32, #tpu.memory_space<smem>>
    %59 = vector.broadcast %58 : f32 to vector<8x128xf32>
    %60 = arith.mulf %59, %5 : vector<8x128xf32>
    %61 = arith.addf %57, %60 : vector<8x128xf32>
    %c11 = arith.constant 11 : index
    %62 = memref.load %arg1[%c11] : memref<32xf32, #tpu.memory_space<smem>>
    %63 = vector.broadcast %62 : f32 to vector<8x128xf32>
    %64 = arith.addf %61, %63 : vector<8x128xf32>
    %c12 = arith.constant 12 : index
    %65 = memref.load %arg1[%c12] : memref<32xf32, #tpu.memory_space<smem>>
    %66 = vector.broadcast %65 : f32 to vector<8x128xf32>
    %67 = arith.mulf %66, %36 : vector<8x128xf32>
    %c13 = arith.constant 13 : index
    %68 = memref.load %arg1[%c13] : memref<32xf32, #tpu.memory_space<smem>>
    %69 = vector.broadcast %68 : f32 to vector<8x128xf32>
    %70 = arith.mulf %69, %50 : vector<8x128xf32>
    %71 = arith.addf %67, %70 : vector<8x128xf32>
    %c14 = arith.constant 14 : index
    %72 = memref.load %arg1[%c14] : memref<32xf32, #tpu.memory_space<smem>>
    %73 = vector.broadcast %72 : f32 to vector<8x128xf32>
    %74 = arith.mulf %73, %64 : vector<8x128xf32>
    %75 = arith.addf %71, %74 : vector<8x128xf32>
    %c15 = arith.constant 15 : index
    %76 = memref.load %arg1[%c15] : memref<32xf32, #tpu.memory_space<smem>>
    %77 = vector.broadcast %76 : f32 to vector<8x128xf32>
    %78 = arith.mulf %77, %36 : vector<8x128xf32>
    %c16 = arith.constant 16 : index
    %79 = memref.load %arg1[%c16] : memref<32xf32, #tpu.memory_space<smem>>
    %80 = vector.broadcast %79 : f32 to vector<8x128xf32>
    %81 = arith.mulf %80, %50 : vector<8x128xf32>
    %82 = arith.addf %78, %81 : vector<8x128xf32>
    %c17 = arith.constant 17 : index
    %83 = memref.load %arg1[%c17] : memref<32xf32, #tpu.memory_space<smem>>
    %84 = vector.broadcast %83 : f32 to vector<8x128xf32>
    %85 = arith.mulf %84, %64 : vector<8x128xf32>
    %86 = arith.addf %82, %85 : vector<8x128xf32>
    %c21 = arith.constant 21 : index
    %87 = memref.load %arg1[%c21] : memref<32xf32, #tpu.memory_space<smem>>
    %c22 = arith.constant 22 : index
    %88 = memref.load %arg1[%c22] : memref<32xf32, #tpu.memory_space<smem>>
    %c23 = arith.constant 23 : index
    %89 = memref.load %arg1[%c23] : memref<32xf32, #tpu.memory_space<smem>>
    %c24 = arith.constant 24 : index
    %90 = memref.load %arg1[%c24] : memref<32xf32, #tpu.memory_space<smem>>
    %cst = arith.constant 0.000000e+00 : f32
    %91 = vector.broadcast %cst : f32 to vector<8x128xf32>
    %92 = arith.cmpf ogt, %64, %91 : vector<8x128xf32>
    %cst_19 = arith.constant 0.000000e+00 : f32
    %93 = vector.broadcast %cst_19 : f32 to vector<8x128xf32>
    %94 = arith.cmpf oge, %75, %93 : vector<8x128xf32>
    %95 = arith.andi %92, %94 : vector<8x128xi1>
    %96 = vector.broadcast %88 : f32 to vector<8x128xf32>
    %97 = arith.mulf %96, %64 : vector<8x128xf32>
    %98 = arith.cmpf olt, %75, %97 : vector<8x128xf32>
    %99 = arith.andi %95, %98 : vector<8x128xi1>
    %cst_20 = arith.constant 0.000000e+00 : f32
    %100 = vector.broadcast %cst_20 : f32 to vector<8x128xf32>
    %101 = arith.cmpf oge, %86, %100 : vector<8x128xf32>
    %102 = arith.andi %99, %101 : vector<8x128xi1>
    %103 = vector.broadcast %87 : f32 to vector<8x128xf32>
    %104 = arith.mulf %103, %64 : vector<8x128xf32>
    %105 = arith.cmpf olt, %86, %104 : vector<8x128xf32>
    %106 = arith.andi %102, %105 : vector<8x128xi1>
    %107 = arith.andi %106, %22 : vector<8x128xi1>
    %108 = tpu.reciprocal %64 : vector<8x128xf32> -> vector<8x128xf32>
    %109 = arith.mulf %75, %108 : vector<8x128xf32>
    %110 = arith.mulf %86, %108 : vector<8x128xf32>
    %111 = arith.subf %109, %7 : vector<8x128xf32>
    %112 = arith.subf %110, %9 : vector<8x128xf32>
    %113 = arith.mulf %111, %111 : vector<8x128xf32>
    %114 = arith.mulf %112, %112 : vector<8x128xf32>
    %115 = arith.addf %113, %114 : vector<8x128xf32>
    %116 = math.sqrt %115 : vector<8x128xf32>
    %cst_21 = arith.constant 0.000000e+00 : f32
    %117 = vector.broadcast %cst_21 : f32 to vector<8x128xf32>
    %118 = arith.select %107, %116, %117 : vector<8x128xi1>, vector<8x128xf32>
    %119 = arith.mulf %118, %11 : vector<8x128xf32>
    %c0_22 = arith.constant 0 : index
    %c0_23 = arith.constant 0 : index
    %c0_24 = arith.constant 0 : index
    %120 = vector.load %arg4[%c0_22, %c0_23, %c0_24] : memref<2x8x128xf32, #tpu.memory_space<vmem>>, vector<1x8x128xf32>
    %121 = vector.shape_cast %120 : vector<1x8x128xf32> to vector<8x128xf32>
    %122 = vector.shape_cast %118 : vector<8x128xf32> to vector<1x8x128xf32>
    tpu.vector_store %arg4[%c0_22, %c0_23, %c0_24], %122 {strides = array<i32>} : memref<2x8x128xf32, #tpu.memory_space<vmem>>, vector<1x8x128xf32>,
    %c1_25 = arith.constant 1 : index
    %c0_26 = arith.constant 0 : index
    %c0_27 = arith.constant 0 : index
    %123 = vector.load %arg4[%c1_25, %c0_26, %c0_27] : memref<2x8x128xf32, #tpu.memory_space<vmem>>, vector<1x8x128xf32>
    %124 = vector.shape_cast %123 : vector<1x8x128xf32> to vector<8x128xf32>
    %125 = vector.shape_cast %119 : vector<8x128xf32> to vector<1x8x128xf32>
    tpu.vector_store %arg4[%c1_25, %c0_26, %c0_27], %125 {strides = array<i32>} : memref<2x8x128xf32, #tpu.memory_space<vmem>>, vector<1x8x128xf32>,
    %126 = vector.broadcast %89 : f32 to vector<8x128xf32>
    %127 = arith.cmpf ogt, %11, %126 : vector<8x128xf32>
    %128 = arith.andi %107, %127 : vector<8x128xi1>
    %129 = vector.broadcast %90 : f32 to vector<8x128xf32>
    %130 = arith.cmpf olt, %118, %129 : vector<8x128xf32>
    %131 = arith.andi %128, %130 : vector<8x128xi1>
    %132 = arith.extui %131 : vector<8x128xi1> to vector<8x128xi32>
    %133 = arith.sitofp %132 : vector<8x128xi32> to vector<8x128xf32>
    %cst_28 = arith.constant dense<0.000000e+00> : vector<128xf32>
    %134 = vector.multi_reduction <add>, %133, %cst_28 [0] : vector<8x128xf32> to vector<128xf32>
    %135 = vector.shape_cast %134 : vector<128xf32> to vector<1x128xf32>
    %136 = arith.extui %128 : vector<8x128xi1> to vector<8x128xi32>
    %137 = arith.sitofp %136 : vector<8x128xi32> to vector<8x128xf32>
    %cst_29 = arith.constant dense<0.000000e+00> : vector<128xf32>
    %138 = vector.multi_reduction <add>, %137, %cst_29 [0] : vector<8x128xf32> to vector<128xf32>
    %139 = vector.shape_cast %138 : vector<128xf32> to vector<1x128xf32>
    %cst_30 = arith.constant 0.000000e+00 : f32
    %140 = vector.broadcast %cst_30 : f32 to vector<6x128xf32>
    %141 = tpu.concatenate %135, %139, %140 in 0 : vector<1x128xf32>, vector<1x128xf32>, vector<6x128xf32> -> vector<8x128xf32>
    %c0_31 = arith.constant 0 : index
    %c0_32 = arith.constant 0 : index
    %c0_33 = arith.constant 0 : index
    %142 = vector.load %arg5[%c0_31, %c0_32, %c0_33] : memref<1x8x128xf32, #tpu.memory_space<vmem>>, vector<1x8x128xf32>
    %143 = vector.shape_cast %142 : vector<1x8x128xf32> to vector<8x128xf32>
    %144 = vector.shape_cast %141 : vector<8x128xf32> to vector<1x8x128xf32>
    tpu.vector_store %arg5[%c0_31, %c0_32, %c0_33], %144 {strides = array<i32>} : memref<1x8x128xf32, #tpu.memory_space<vmem>>, vector<1x8x128xf32>,
    return
  }
  func.func @transform_0(%arg0: i32) -> i32 {
    %c0_i32 = arith.constant 0 : i32
    %c0_i32_0 = arith.constant 0 : i32
    return %c0_i32 : i32
  }
  func.func @transform_1(%arg0: i32) -> i32 {
    %c0_i32 = arith.constant 0 : i32
    %c0_i32_0 = arith.constant 0 : i32
    return %c0_i32 : i32
  }
  func.func @transform_2(%arg0: i32) -> (i32, i32, i32) {
    %c0_i32 = arith.constant 0 : i32
    %c0_i32_0 = arith.constant 0 : i32
    %c0_i32_1 = arith.constant 0 : i32
    return %c0_i32, %arg0, %c0_i32_0 : i32, i32, i32
  }
  func.func @transform_3(%arg0: i32) -> (i32, i32, i32) {
    %c0_i32 = arith.constant 0 : i32
    %c0_i32_0 = arith.constant 0 : i32
    %c0_i32_1 = arith.constant 0 : i32
    return %c0_i32, %arg0, %c0_i32_0 : i32, i32, i32
  }
  func.func @transform_4(%arg0: i32) -> (i32, i32, i32) {
    %c0_i32 = arith.constant 0 : i32
    %c0_i32_0 = arith.constant 0 : i32
    %c0_i32_1 = arith.constant 0 : i32
    return %arg0, %c0_i32, %c0_i32_0 : i32, i32, i32
  }
}

</mosaic_0001>

<llo_original>
// kernel: tpu_custom_call.1
$region0: #{tpu_custom_call.1}
  #allocation0 [shape = 'u32[]', space=smem, size = 0x4, offset = 0x4, fixed_abs, tag = 'smem constant byte address 0x4 - core index']
  #allocation1 [shape = 'u32[144,128]{1,0:T(1,128)}', space=vmem, size = 0x12000, scoped, tag = 'internal scratch']
  #allocation2 [shape = 's32[1]{0:T(128)S(6)}', space=smem, size = 0x200, scoped, tag = 'scoped memory for tpu_custom_call.1']
  %s0 = inlined_call_operand.vmem [shape: f32[32], index: 0, kind: input, shape index: {}]
  %s1 = inlined_call_operand.<no memory space> [shape: s32[1], index: 1, kind: input, shape index: {}]
  %s2 = inlined_call_operand.hbm [shape: f32[6,8,128], index: 2, kind: input, shape index: {}]
  %s3 = inlined_call_operand.hbm [shape: f32[2,8,128], index: 3, kind: output, shape index: {0}]
  %s4 = inlined_call_operand.hbm [shape: f32[1,8,128], index: 4, kind: output, shape index: {1}]
  %5 = xla_tuple %s3, %s4
  %s6 = sld [smem:[#allocation0]]
  $region38: #{tpu_custom_call.1} parent=0
    _
  %s8 = ssub.s32 1, %s6
  %s9 = scalar_select 0, %s8, %s6
  %10 = sst [smem:[#allocation2]] %s1
  $region1: #{tpu_custom_call.1} parent=0
    #allocation3 [shape = 'u8[512]{0}', space=smem, size = 0x200, scoped, tag = 'input window, operand 0, single buffered']
    #allocation4 [shape = 's32[1]{0}', space=sflag, size = 0x4, scoped, tag = 'scoped memory for tpu_custom_call.1']
    #allocation5 [shape = 's32[1]{0}', space=sflag, size = 0x4, scoped, tag = 'scoped memory for tpu_custom_call.1']
    #allocation6 [shape = 's32[1]{0}', space=sflag, size = 0x4, scoped, tag = 'scoped memory for tpu_custom_call.1']
    #allocation7 [shape = 'u8[24576]{0}', space=vmem, size = 0x6000, scoped, tag = 'input window, operand 2, single buffered']
    #allocation8 [shape = 'u8[8192]{0}', space=vmem, size = 0x2000, scoped, tag = 'output window, operand 0, single buffered']
    #allocation9 [shape = 'u8[4096]{0}', space=vmem, size = 0x1000, scoped, tag = 'output window, operand 1, single buffered']
    #allocation10 [shape = 's32[1]{0}', space=sflag, size = 0x4, scoped, tag = 'scoped memory for tpu_custom_call.1']
    %11 = vsyncpa [#allocation6], 0
    %12 = vsyncpa [#allocation4], 0
    %13 = vsyncpa [#allocation5], 0
    %14 = vsyncpa [#allocation10], 0
    // Predicated region
    $region2: #{tpu_custom_call.1} parent=1 // pred_check
      _
    $region3: #{tpu_custom_call.1} parent=1 // pred_check_branch
      %16 = sbr.rel (0) target = $region5
    $region4: #{tpu_custom_call.1} parent=1 // pred_region
      %s18 = ssub.s32 16, 16
      %19 = vsyncadd [#allocation6], %s18
      %s21 = sshll.u32 %s0, 4
      %s22 = int_to_ptr.vmem [resolvable:$true] %s21
      %24 = dma.vmem_to_smem %s22, 16, [#allocation3], [#allocation6]
    $region5: #{tpu_custom_call.1} parent=1 // pred_fallthru
      _
    // Predicated region
    $region6: #{tpu_custom_call.1} parent=1 // pred_check
      _
    $region7: #{tpu_custom_call.1} parent=1 // pred_check_branch
      %26 = sbr.rel (0) target = $region9
    $region8: #{tpu_custom_call.1} parent=1 // pred_region
      _
    $region9: #{tpu_custom_call.1} parent=1 // pred_fallthru
      _
    // Predicated region
    $region10: #{tpu_custom_call.1} parent=1 // pred_check
      _
    $region11: #{tpu_custom_call.1} parent=1 // pred_check_branch
      %28 = sbr.rel (0) target = $region13
    $region12: #{tpu_custom_call.1} parent=1 // pred_region
      %s30 = ssub.s32 768, 768
      %31 = vsyncadd [#allocation4], %s30
      %s32 = sshll.u32 [#allocation7], 4
      %s33 = int_to_ptr.vmem [resolvable:$true] %s32
      %38 = dma.hbm_to_vmem [thread:$0]  %s2, 768, %s33, [#allocation4], 128, 128, 8
    $region13: #{tpu_custom_call.1} parent=1 // pred_fallthru
      _
    // Predicated region
    $region14: #{tpu_custom_call.1} parent=1 // pred_check
      _
    $region15: #{tpu_custom_call.1} parent=1 // pred_check_branch
      %40 = sbr.rel (0) target = $region17
    $region16: #{tpu_custom_call.1} parent=1 // pred_region
      %41 = dma.done [#allocation6], 16
    $region17: #{tpu_custom_call.1} parent=1 // pred_fallthru
      _
    // Predicated region
    $region18: #{tpu_custom_call.1} parent=1 // pred_check
      _
    $region19: #{tpu_custom_call.1} parent=1 // pred_check_branch
      %43 = sbr.rel (0) target = $region21
    $region20: #{tpu_custom_call.1} parent=1 // pred_region
      %44 = dma.done [#allocation4], 768
    $region21: #{tpu_custom_call.1} parent=1 // pred_fallthru
      _
    %45 = sfence
    %v46 = vld [vmem:[#allocation7] sm:$0xff]
    %s47 = scalar_lea.vmem [#allocation7], 8
    %v48 = vld [vmem:[%s47] sm:$0xff]
    %s49 = scalar_lea.vmem [#allocation7], 16
    %v50 = vld [vmem:[%s49] sm:$0xff]
    %s51 = scalar_lea.vmem [#allocation7], 24
    %v52 = vld [vmem:[%s51] sm:$0xff]
    %s53 = scalar_lea.vmem [#allocation7], 32
    %v54 = vld [vmem:[%s53] sm:$0xff]
    %s55 = scalar_lea.vmem [#allocation7], 40
    %v56 = vld [vmem:[%s55] sm:$0xff]
    %v57 = vlaneseq
    %v58 = vshrl.u32 %v57, 7
    %v59 = vlaneseq
    %v60 = vand.u32 %v59, 127
    %s61 = smul.u32 0, 8
    %v62 = vstv %s61
    %v63 = vadd.s32 %v62, %v58
    %v64 = vmul.u32 %v63, 128
    %v65 = vadd.s32 %v64, %v60
    %s66 = sld [smem:[#allocation2]]
    %v67 = vstv %s66
    %vm68 = vcmp.lt.s32.totalorder %v65, %v67
    %s69 = sld [smem:[#allocation3]]
    %v70 = vstv %s69
    %v71 = vmul.f32 %v70, %v46
    %s72 = sld [smem:[#allocation3 + $0x1]]
    %v73 = vstv %s72
    %v74 = vmul.f32 %v73, %v48
    %v75 = vadd.f32 %v71, %v74
    %s76 = sld [smem:[#allocation3 + $0x2]]
    %v77 = vstv %s76
    %v78 = vmul.f32 %v77, %v50
    %v79 = vadd.f32 %v75, %v78
    %s80 = sld [smem:[#allocation3 + $0x3]]
    %v81 = vstv %s80
    %v82 = vadd.f32 %v79, %v81
    %s83 = sld [smem:[#allocation3 + $0x4]]
    %v84 = vstv %s83
    %v85 = vmul.f32 %v84, %v46
    %s86 = sld [smem:[#allocation3 + $0x5]]
    %v87 = vstv %s86
    %v88 = vmul.f32 %v87, %v48
    %v89 = vadd.f32 %v85, %v88
    %s90 = sld [smem:[#allocation3 + $0x6]]
    %v91 = vstv %s90
    %v92 = vmul.f32 %v91, %v50
    %v93 = vadd.f32 %v89, %v92
    %s94 = sld [smem:[#allocation3 + $0x7]]
    %v95 = vstv %s94
    %v96 = vadd.f32 %v93, %v95
    %s97 = sld [smem:[#allocation3 + $0x8]]
    %v98 = vstv %s97
    %v99 = vmul.f32 %v98, %v46
    %s100 = sld [smem:[#allocation3 + $0x9]]
    %v101 = vstv %s100
    %v102 = vmul.f32 %v101, %v48
    %v103 = vadd.f32 %v99, %v102
    %s104 = sld [smem:[#allocation3 + $0xa]]
    %v105 = vstv %s104
    %v106 = vmul.f32 %v105, %v50
    %v107 = vadd.f32 %v103, %v106
    %s108 = sld [smem:[#allocation3 + $0xb]]
    %v109 = vstv %s108
    %v110 = vadd.f32 %v107, %v109
    %s111 = sld [smem:[#allocation3 + $0xc]]
    %v112 = vstv %s111
    %v113 = vmul.f32 %v112, %v82
    %s114 = sld [smem:[#allocation3 + $0xd]]
    %v115 = vstv %s114
    %v116 = vmul.f32 %v115, %v96
    %v117 = vadd.f32 %v113, %v116
    %s118 = sld [smem:[#allocation3 + $0xe]]
    %v119 = vstv %s118
    %v120 = vmul.f32 %v119, %v110
    %v121 = vadd.f32 %v117, %v120
    %s122 = sld [smem:[#allocation3 + $0xf]]
    %v123 = vstv %s122
    %v124 = vmul.f32 %v123, %v82
    %s125 = sld [smem:[#allocation3 + $0x10]]
    %v126 = vstv %s125
    %v127 = vmul.f32 %v126, %v96
    %v128 = vadd.f32 %v124, %v127
    %s129 = sld [smem:[#allocation3 + $0x11]]
    %v130 = vstv %s129
    %v131 = vmul.f32 %v130, %v110
    %v132 = vadd.f32 %v128, %v131
    %s133 = sld [smem:[#allocation3 + $0x15]]
    %s134 = sld [smem:[#allocation3 + $0x16]]
    %s135 = sld [smem:[#allocation3 + $0x17]]
    %s136 = sld [smem:[#allocation3 + $0x18]]
    %vm137 = vcmp.gt.f32.partialorder %v110, 0.0
    %vm138 = vcmp.ge.f32.partialorder %v121, 0.0
    %vm139 = vmand %vm137, %vm138
    %v140 = vstv %s134
    %v141 = vmul.f32 %v140, %v110
    %vm142 = vcmp.lt.f32.partialorder %v121, %v141
    %vm143 = vmand %vm139, %vm142
    %vm144 = vcmp.ge.f32.partialorder %v132, 0.0
    %vm145 = vmand %vm143, %vm144
    %v146 = vstv %s133
    %v147 = vmul.f32 %v146, %v110
    %vm148 = vcmp.lt.f32.partialorder %v132, %v147
    %vm149 = vmand %vm145, %vm148
    %vm150 = vmand %vm149, %vm68
    %v151 = vrcp.pop %v110
    %v152 = vmul.f32 %v121, %v151
    %v153 = vmul.f32 %v132, %v151
    %v154 = vsub.f32 %v152, %v52
    %v155 = vsub.f32 %v153, %v54
    %v156 = vmul.f32 %v154, %v154
    %v157 = vmul.f32 %v155, %v155
    %v158 = vadd.f32 %v156, %v157
    %v159 = vrsqrt.pop %v158
    %v160 = vmul.f32 %v158, %v159
    %vm161 = vcmp.eq.f32.partialorder %v158, inf
    %v162 = vsel %vm161, %v158, %v160
    %vm163 = vcmp.eq.f32.partialorder %v158, 0.0
    %v164 = vand.u32 %v158, 2147483648
    %v165 = vsel %vm163, %v164, %v162
    %v166 = vsel %vm150, %v165, 0.0
    %v167 = vmul.f32 %v166, %v56
    %168 = vst [vmem:[#allocation8] sm:$0xff] %v166
    %s169 = scalar_lea.vmem [#allocation8], 8
    %170 = vst [vmem:[%s169] sm:$0xff] %v167
    %v171 = vstv %s135
    %vm172 = vcmp.gt.f32.partialorder %v56, %v171
    %vm173 = vmand %vm150, %vm172
    %v174 = vstv %s136
    %vm175 = vcmp.lt.f32.partialorder %v166, %v174
    %vm176 = vmand %vm173, %vm175
    %v177 = vsel %vm176, 1, 0
    %v178 = vcvt.s32.f32 %v177
    %v179 = vrot.slane %v178, 4
    %v180 = vadd.f32 %v178, %v179
    %v181 = vrot.slane %v180, 2
    %v182 = vadd.f32 %v180, %v181
    %v183 = vrot.slane %v182, 1
    %v184 = vadd.f32 %v182, %v183
    %v185 = vsel %vm173, 1, 0
    %v186 = vcvt.s32.f32 %v185
    %v187 = vrot.slane %v186, 4
    %v188 = vadd.f32 %v186, %v187
    %v189 = vrot.slane %v188, 2
    %v190 = vadd.f32 %v188, %v189
    %v191 = vrot.slane %v190, 1
    %v192 = vadd.f32 %v190, %v191
    %vm193 = vcmask 1040384
    %v194 = vsel %vm193, %v184, %v192
    %vm195 = vcmask 1041408
    %v196 = vsel %vm195, %v194, 0.0
    %197 = vst [vmem:[#allocation9] sm:$0xff] %v196
    // Predicated region
    $region22: #{tpu_custom_call.1} parent=1 // pred_check
      _
    $region23: #{tpu_custom_call.1} parent=1 // pred_check_branch
      %199 = sbr.rel (0) target = $region25
    $region24: #{tpu_custom_call.1} parent=1 // pred_region
      %s201 = ssub.s32 256, 256
      %202 = vsyncadd [#allocation5], %s201
      %s203 = sshll.u32 [#allocation8], 4
      %s204 = int_to_ptr.vmem [resolvable:$true] %s203
      %209 = dma.vmem_to_hbm [thread:$0]  %s204, 256, %s3, [#allocation5], 128, 128, 8
    $region25: #{tpu_custom_call.1} parent=1 // pred_fallthru
      _
    // Predicated region
    $region26: #{tpu_custom_call.1} parent=1 // pred_check
      _
    $region27: #{tpu_custom_call.1} parent=1 // pred_check_branch
      %211 = sbr.rel (0) target = $region29
    $region28: #{tpu_custom_call.1} parent=1 // pred_region
      %s213 = ssub.s32 128, 128
      %214 = vsyncadd [#allocation10], %s213
      %s216 = sshll.u32 [#allocation9], 4
      %s217 = int_to_ptr.vmem [resolvable:$true] %s216
      %219 = dma.vmem_to_hbm [thread:$0]  %s217, 128, %s4, [#allocation10]
    $region29: #{tpu_custom_call.1} parent=1 // pred_fallthru
      _
    // Predicated region
    $region30: #{tpu_custom_call.1} parent=1 // pred_check
      _
    $region31: #{tpu_custom_call.1} parent=1 // pred_check_branch
      %221 = sbr.rel (0) target = $region33
    $region32: #{tpu_custom_call.1} parent=1 // pred_region
      %222 = dma.done [#allocation5], 256
    $region33: #{tpu_custom_call.1} parent=1 // pred_fallthru
      _
    // Predicated region
    $region34: #{tpu_custom_call.1} parent=1 // pred_check
      _
    $region35: #{tpu_custom_call.1} parent=1 // pred_check_branch
      %224 = sbr.rel (0) target = $region37
    $region36: #{tpu_custom_call.1} parent=1 // pred_region
      %225 = dma.done [#allocation10], 128
    $region37: #{tpu_custom_call.1} parent=1 // pred_fallthru
      _
    %226 = vsyncpa [#allocation4], 1
    %227 = vsyncpa [#allocation5], 1
    %228 = vsyncpa [#allocation10], 1
    %229 = vsyncpa [#allocation6], 1

</llo_original>
